<compile_context>
chip_gen: v5e
topology: v5e:2x2
jax: 0.10.0
libtpu: 0.0.40
codegen_flags: <defaults>
</compile_context>

<pallas_src>
import jax
import jax.numpy as jnp
from jax.experimental import pallas as pl
from jax.experimental.pallas import tpu as pltpu


def _softplus(x):
    # Numerically stable softplus. torch.nn.functional.softplus returns x
    # exactly for x > 20; here the correction log1p(exp(-|x|)) underflows to
    # the same f32 value, so the results match to f32 precision.
    return jnp.maximum(x, 0.0) + jnp.log1p(jnp.exp(-jnp.abs(x)))


# -----------------------------------------------------------------------------
# Fused kernel. One lane-dense output slab:
#   out[:, 0:VC]        = Softplus(ReLU(x @ W1_bd + b1) @ W2_bd + b2)   (packed evidences)
#   out[:, VC:VC+C]     = ev_packed @ W_fuse                            (evidence_a)
#   out[:, VC+C:VC+C+V] = Softplus(ReLU(x0 @ Wg1 + bg1) @ Wg2 + bg2)    (wg)
#   out[:, VC+C+V:]     = 0                                             (lane padding)
# -----------------------------------------------------------------------------
def _make_kernel(pad_lanes, bf16_dots):
    def kernel(x_ref, w1_ref, b1_ref, w2_ref, b2_ref, wf_ref,
               gw1_ref, gb1_ref, gw2_ref, gb2_ref, out_ref):
        x = x_ref[...]                                            # (bt, V*D) f32
        dt = jnp.bfloat16 if bf16_dots else x.dtype               # dot-operand dtype only

        # All V evidence heads in one block-diagonal MXU contraction.
        h = jnp.dot(x.astype(dt), w1_ref[...].astype(dt),
                    preferred_element_type=jnp.float32) + b1_ref[...]
        h = jnp.maximum(h, 0.0)
        ev = _softplus(jnp.dot(h.astype(dt), w2_ref[...].astype(dt),
                               preferred_element_type=jnp.float32) + b2_ref[...])

        # Weighted fusion: sum_v ev_v * e_parameters[v] == ev_packed @ W_fuse.
        # Kept in-kernel: it rides an otherwise idle MXU slot; moving it to the
        # wrapper would re-add a dispatch.
        ea = jnp.dot(ev.astype(dt), wf_ref[...].astype(dt),
                     preferred_element_type=jnp.float32)

        # "wg" MLP reads view 0 only (first D lanes of the packed input).
        d_in = gw1_ref.shape[0]
        x0 = x[:, :d_in]
        hg = jnp.maximum(jnp.dot(x0.astype(dt), gw1_ref[...].astype(dt),
                                 preferred_element_type=jnp.float32) + gb1_ref[...],
                         0.0)
        wg = _softplus(jnp.dot(hg.astype(dt), gw2_ref[...].astype(dt),
                               preferred_element_type=jnp.float32) + gb2_ref[...])

        # Lane-pack everything into one lane-dense 128-wide slab -> a single
        # unmasked full-width store and one writeback DMA per grid step.
        zeros = jnp.zeros((x.shape[0], pad_lanes), jnp.float32)
        out_ref[...] = jnp.concatenate([ev, ea, wg, zeros], axis=1).astype(out_ref.dtype)

    return kernel


def _pick_batch_tile(batch):
    # Tiny/moderate batches: a single grid step (per-step overhead ~0.35 us
    # dominates this launch-bound kernel).
    if batch <= 256:
        return batch
    # Larger batches: >=2 "parallel" steps so v7x's second TensorCore shares
    # work; cap the tile at 2048 rows (a few MiB double-buffered, trivially
    # inside 64 MiB v7x VMEM, let alone 128 MiB v5e/v6e).
    bt = min(2048, -(-batch // 2))
    return max(8, (bt // 8) * 8)


def rcml_fused(x_packed, w1_bd, b1_cat, w2_bd, b2_cat, w_fuse,
               wg_w1, wg_b1, wg_w2, wg_b2, *, bf16_dots=False):
    B, VD = x_packed.shape
    VH = w1_bd.shape[1]
    VC = w2_bd.shape[1]
    C = w_fuse.shape[1]
    D, GH = wg_w1.shape
    V = wg_w2.shape[1]

    used_lanes = VC + C + V
    out_w = max(128, -(-used_lanes // 128) * 128)     # round lanes up to 128
    pad_lanes = out_w - used_lanes

    bt = _pick_batch_tile(B)
    grid = (pl.cdiv(B, bt),)
    # NOTE: tail grid blocks (B % bt != 0) are write-masked by Pallas, so
    # results stay correct; garbage rows may flow through exp() but never land.

    flops = 2 * B * (VD * VH + VH * VC + VC * C + D * GH + GH * V)
    transcendentals = 2 * B * (VC + V)                # exp + log1p per softplus lane
    bytes_accessed = 4 * (x_packed.size + w1_bd.size + b1_cat.size + w2_bd.size
                          + b2_cat.size + w_fuse.size + wg_w1.size + wg_b1.size
                          + wg_w2.size + wg_b2.size + B * out_w)

    packed = pl.pallas_call(
        _make_kernel(pad_lanes, bf16_dots),
        out_shape=jax.ShapeDtypeStruct((B, out_w), jnp.float32),
        grid=grid,
        in_specs=[
            pl.BlockSpec((bt, VD), lambda i: (i, 0)),     # packed activations
            pl.BlockSpec((VD, VH), lambda i: (0, 0)),     # block-diag W1
            pl.BlockSpec((1, VH), lambda i: (0, 0)),      # b1 (concat)
            pl.BlockSpec((VH, VC), lambda i: (0, 0)),     # block-diag W2
            pl.BlockSpec((1, VC), lambda i: (0, 0)),      # b2 (concat)
            pl.BlockSpec((VC, C), lambda i: (0, 0)),      # kron(e_parameters, I_C)
            pl.BlockSpec((D, GH), lambda i: (0, 0)),      # wg W1
            pl.BlockSpec((1, GH), lambda i: (0, 0)),      # wg b1
            pl.BlockSpec((GH, V), lambda i: (0, 0)),      # wg W2
            pl.BlockSpec((1, V), lambda i: (0, 0)),       # wg b2
        ],
        out_specs=pl.BlockSpec((bt, out_w), lambda i: (i, 0)),
        compiler_params=pltpu.CompilerParams(
            dimension_semantics=("parallel",),
            vmem_limit_bytes=64 << 20),
        cost_estimate=pl.CostEstimate(flops=flops,
                                      transcendentals=transcendentals,
                                      bytes_accessed=bytes_accessed),
    )(x_packed, w1_bd, b1_cat, w2_bd, b2_cat, w_fuse,
      wg_w1, wg_b1, wg_w2, wg_b2)

    ev_packed = packed[:, :VC]
    evidence_a = packed[:, VC:VC + C]
    wg = packed[:, VC + C:VC + C + V]
    return ev_packed, evidence_a, wg


# -----------------------------------------------------------------------------
# Parameters (deterministic synthetic init), one-time packing, and forward
# -----------------------------------------------------------------------------
def init_params(key, num_views, d_in, hidden, num_classes, wg_hidden=256):
    ks = jax.random.split(key, 6)
    return {
        "num_views": num_views,
        # nn.Parameter(torch.tensor([...])) -- fixed 6-element fusion weights.
        "e_parameters": jnp.array([0.291, 0.1555, 0.1661, 0.1386, 0.1071, 0.1417],
                                  dtype=jnp.float32),
        # nn.Parameter(torch.ones(num_views, dims[0][0])) -- unused in forward().
        "atten_para": jnp.ones((num_views, d_in), jnp.float32),
        # per-view EvidenceCollector: Linear(d_in,H) -> ReLU -> Linear(H,C) -> Softplus
        "ev_w1": 0.1 * jax.random.normal(ks[0], (num_views, d_in, hidden), jnp.float32),
        "ev_b1": 0.01 * jax.random.normal(ks[1], (num_views, 1, hidden), jnp.float32),
        "ev_w2": 0.1 * jax.random.normal(ks[2], (num_views, hidden, num_classes), jnp.float32),
        "ev_b2": 0.01 * jax.random.normal(ks[3], (num_views, 1, num_classes), jnp.float32),
        # the MLP ("wg"): Linear(d_in,256) -> ReLU -> Linear(256,num_views) -> Softplus
        "wg_w1": 0.1 * jax.random.normal(ks[4], (d_in, wg_hidden), jnp.float32),
        "wg_b1": jnp.zeros((1, wg_hidden), jnp.float32),
        "wg_w2": 0.1 * jax.random.normal(ks[5], (wg_hidden, num_views), jnp.float32),
        "wg_b2": jnp.zeros((1, num_views), jnp.float32),
    }


def prepare_fused_params(params):
    """One-time packing of the per-view weights for the fused kernel.

    Hoisted out of the per-call forward path: at these sizes the kernel is
    sub-microsecond, so the ~10 small HLO ops that build the block-diagonal
    weights must not be re-emitted every call.
    """
    V = params["num_views"]
    E = params["e_parameters"]
    assert E.shape[0] == V, (
        "e_parameters is hard-coded to 6 entries in the PyTorch module; "
        f"num_views={V} is inconsistent.")
    C = params["ev_w2"].shape[2]

    w1_bd = jax.scipy.linalg.block_diag(*[params["ev_w1"][v] for v in range(V)])
    w2_bd = jax.scipy.linalg.block_diag(*[params["ev_w2"][v] for v in range(V)])
    b1_cat = params["ev_b1"].reshape(1, -1)                        # (1, V*H)
    b2_cat = params["ev_b2"].reshape(1, -1)                        # (1, V*C)
    # W_fuse = kron(e_parameters, I_C) => ev_packed @ W_fuse reproduces the
    # PyTorch loop  evidence_a = sum_v evidences[v] * e_parameters[v].
    w_fuse = (E[:, None, None] * jnp.eye(C, dtype=jnp.float32)).reshape(V * C, C)

    return {
        "num_views": V, "num_classes": C,
        "w1_bd": w1_bd, "b1_cat": b1_cat,
        "w2_bd": w2_bd, "b2_cat": b2_cat,
        "w_fuse": w_fuse,
        "wg_w1": params["wg_w1"], "wg_b1": params["wg_b1"],
        "wg_w2": params["wg_w2"], "wg_b2": params["wg_b2"],
    }


def statistics_rcml_forward(fused_params, X):
    """X: list of num_views arrays, each (B, D). Returns (evidences dict, evidence_a)."""
    V = fused_params["num_views"]
    C = fused_params["num_classes"]

    x_packed = jnp.concatenate(X, axis=1)                          # (B, V*D)
    ev_packed, evidence_a, wg = rcml_fused(
        x_packed,
        fused_params["w1_bd"], fused_params["b1_cat"],
        fused_params["w2_bd"], fused_params["b2_cat"], fused_params["w_fuse"],
        fused_params["wg_w1"], fused_params["wg_b1"],
        fused_params["wg_w2"], fused_params["wg_b2"])

    evidences = {"wg": wg}
    for v in range(V):
        evidences[v] = ev_packed[:, v * C:(v + 1) * C]
    return evidences, evidence_a


def _reference_forward(params, X):
    """Plain-JAX reference of Statistics_RCML.forward (highest matmul precision)."""
    V = params["num_views"]
    hi = jax.lax.Precision.HIGHEST

    def mlp2(x, w1, b1, w2, b2):
        h = jnp.maximum(jnp.dot(x, w1, precision=hi) + b1, 0.0)
        return jax.nn.softplus(jnp.dot(h, w2, precision=hi) + b2)

    wg = mlp2(X[0], params["wg_w1"], params["wg_b1"],
              params["wg_w2"], params["wg_b2"])
    evs = [mlp2(X[v], params["ev_w1"][v], params["ev_b1"][v],
                params["ev_w2"][v], params["ev_b2"][v]) for v in range(V)]
    evidence_a = sum(ev * params["e_parameters"][v] for v, ev in enumerate(evs))
    return wg, evs, evidence_a


if __name__ == "__main__":
    NUM_VIEWS = 6          # fixed by the hard-coded 6-element e_parameters
    B, D_IN, HID, NUM_CLASSES = 8, 32, 32, 10

    root = jax.random.PRNGKey(0)
    k_params, k_data = jax.random.split(root)

    params = init_params(k_params, NUM_VIEWS, D_IN, HID, NUM_CLASSES)
    fused_params = prepare_fused_params(params)     # one-time weight packing

    data_keys = jax.random.split(k_data, NUM_VIEWS)
    X = [jax.random.normal(data_keys[v], (B, D_IN), jnp.float32)
         for v in range(NUM_VIEWS)]

    evidences, evidence_a = statistics_rcml_forward(fused_params, X)
    jax.block_until_ready(evidence_a)
    jax.block_until_ready(evidences["wg"])

    assert evidences["wg"].shape == (B, NUM_VIEWS)
    assert evidence_a.shape == (B, NUM_CLASSES)
    for v in range(NUM_VIEWS):
        assert evidences[v].shape == (B, NUM_CLASSES)

    # Cross-check against plain JAX; all-f32 path -> tight tolerance.
    wg_ref, evs_ref, ea_ref = _reference_forward(params, X)
    tol = dict(rtol=1e-4, atol=1e-4)
    assert jnp.allclose(evidences["wg"], wg_ref, **tol)
    assert jnp.allclose(evidence_a, ea_ref, **tol)
    for v in range(NUM_VIEWS):
        assert jnp.allclose(evidences[v], evs_ref[v], **tol)

    print("KERNEL_OK")
</pallas_src>

<mosaic_0001>
module attributes {stable_mosaic.version = 11 : i64} {
  func.func @kernel(%arg0: i32, %arg1: memref<8x192xf32, #tpu.memory_space<vmem>>, %arg2: memref<192x192xf32, #tpu.memory_space<vmem>>, %arg3: memref<1x192xf32, #tpu.memory_space<vmem>>, %arg4: memref<192x60xf32, #tpu.memory_space<vmem>>, %arg5: memref<1x60xf32, #tpu.memory_space<vmem>>, %arg6: memref<60x10xf32, #tpu.memory_space<vmem>>, %arg7: memref<32x256xf32, #tpu.memory_space<vmem>>, %arg8: memref<1x256xf32, #tpu.memory_space<vmem>>, %arg9: memref<256x6xf32, #tpu.memory_space<vmem>>, %arg10: memref<1x6xf32, #tpu.memory_space<vmem>>, %arg11: memref<8x128xf32, #tpu.memory_space<vmem>>) attributes {dimension_semantics = [#tpu.dimension_semantics<parallel>], iteration_bounds = array<i64: 1>, scalar_prefetch = 0 : i64, scratch_operands = 0 : i64, tpu.core_type = #tpu.core_type<tc>, window_params = [{transform_indices = @transform_0, window_bounds = array<i64: 8, 192>}, {pipeline_mode = #tpu.pipeline_mode<synchronous>, transform_indices = @transform_1, window_bounds = array<i64: 192, 192>}, {pipeline_mode = #tpu.pipeline_mode<synchronous>, transform_indices = @transform_2, window_bounds = array<i64: 1, 192>}, {pipeline_mode = #tpu.pipeline_mode<synchronous>, transform_indices = @transform_3, window_bounds = array<i64: 192, 60>}, {pipeline_mode = #tpu.pipeline_mode<synchronous>, transform_indices = @transform_4, window_bounds = array<i64: 1, 60>}, {pipeline_mode = #tpu.pipeline_mode<synchronous>, transform_indices = @transform_5, window_bounds = array<i64: 60, 10>}, {pipeline_mode = #tpu.pipeline_mode<synchronous>, transform_indices = @transform_6, window_bounds = array<i64: 32, 256>}, {pipeline_mode = #tpu.pipeline_mode<synchronous>, transform_indices = @transform_7, window_bounds = array<i64: 1, 256>}, {pipeline_mode = #tpu.pipeline_mode<synchronous>, transform_indices = @transform_8, window_bounds = array<i64: 256, 6>}, {pipeline_mode = #tpu.pipeline_mode<synchronous>, transform_indices = @transform_9, window_bounds = array<i64: 1, 6>}, {transform_indices = @transform_10, window_bounds = array<i64: 8, 128>}]} {
    %c0 = arith.constant 0 : index
    %c0_0 = arith.constant 0 : index
    %0 = vector.load %arg1[%c0, %c0_0] : memref<8x192xf32, #tpu.memory_space<vmem>>, vector<8x192xf32>
    %c0_1 = arith.constant 0 : index
    %c0_2 = arith.constant 0 : index
    %1 = vector.load %arg2[%c0_1, %c0_2] : memref<192x192xf32, #tpu.memory_space<vmem>>, vector<192x192xf32>
    %cst = arith.constant dense<0.000000e+00> : vector<8x192xf32>
    %2 = tpu.matmul %0, %1, %cst {dimension_numbers = #tpu.dot_dimension_numbers<[1], [0], [0], [1], [0, 0, 1, 1], [], []>} : vector<8x192xf32>, vector<192x192xf32>, vector<8x192xf32> -> vector<8x192xf32>
    %c0_3 = arith.constant 0 : index
    %c0_4 = arith.constant 0 : index
    %3 = vector.load %arg3[%c0_3, %c0_4] : memref<1x192xf32, #tpu.memory_space<vmem>>, vector<1x192xf32>
    %4 = vector.broadcast %3 : vector<1x192xf32> to vector<8x192xf32>
    %5 = arith.addf %2, %4 : vector<8x192xf32>
    %cst_5 = arith.constant 0.000000e+00 : f32
    %6 = vector.broadcast %cst_5 : f32 to vector<8x192xf32>
    %7 = arith.maximumf %5, %6 : vector<8x192xf32>
    %c0_6 = arith.constant 0 : index
    %c0_7 = arith.constant 0 : index
    %8 = vector.load %arg4[%c0_6, %c0_7] : memref<192x60xf32, #tpu.memory_space<vmem>>, vector<192x60xf32>
    %cst_8 = arith.constant dense<0.000000e+00> : vector<8x60xf32>
    %9 = tpu.matmul %7, %8, %cst_8 {dimension_numbers = #tpu.dot_dimension_numbers<[1], [0], [0], [1], [0, 0, 1, 1], [], []>} : vector<8x192xf32>, vector<192x60xf32>, vector<8x60xf32> -> vector<8x60xf32>
    %c0_9 = arith.constant 0 : index
    %c0_10 = arith.constant 0 : index
    %10 = vector.load %arg5[%c0_9, %c0_10] : memref<1x60xf32, #tpu.memory_space<vmem>>, vector<1x60xf32>
    %11 = vector.broadcast %10 : vector<1x60xf32> to vector<8x60xf32>
    %12 = arith.addf %9, %11 : vector<8x60xf32>
    %cst_11 = arith.constant 0.000000e+00 : f32
    %13 = vector.broadcast %cst_11 : f32 to vector<8x60xf32>
    %14 = arith.maximumf %12, %13 : vector<8x60xf32>
    %15 = math.absf %12 : vector<8x60xf32>
    %cst_12 = arith.constant 0.000000e+00 : f32
    %16 = vector.broadcast %cst_12 : f32 to vector<8x60xf32>
    %17 = arith.subf %16, %15 : vector<8x60xf32>
    %18 = math.exp %17 : vector<8x60xf32>
    %19 = math.log1p %18 : vector<8x60xf32>
    %20 = arith.addf %14, %19 : vector<8x60xf32>
    %c0_13 = arith.constant 0 : index
    %c0_14 = arith.constant 0 : index
    %21 = vector.load %arg6[%c0_13, %c0_14] : memref<60x10xf32, #tpu.memory_space<vmem>>, vector<60x10xf32>
    %cst_15 = arith.constant dense<0.000000e+00> : vector<8x10xf32>
    %22 = tpu.matmul %20, %21, %cst_15 {dimension_numbers = #tpu.dot_dimension_numbers<[1], [0], [0], [1], [0, 0, 1, 1], [], []>} : vector<8x60xf32>, vector<60x10xf32>, vector<8x10xf32> -> vector<8x10xf32>
    %23 = vector.extract_strided_slice %0 {offsets = [0, 0], sizes = [8, 32], strides = [1, 1]} : vector<8x192xf32> to vector<8x32xf32>
    %c0_16 = arith.constant 0 : index
    %c0_17 = arith.constant 0 : index
    %24 = vector.load %arg7[%c0_16, %c0_17] : memref<32x256xf32, #tpu.memory_space<vmem>>, vector<32x256xf32>
    %cst_18 = arith.constant dense<0.000000e+00> : vector<8x256xf32>
    %25 = tpu.matmul %23, %24, %cst_18 {dimension_numbers = #tpu.dot_dimension_numbers<[1], [0], [0], [1], [0, 0, 1, 1], [], []>} : vector<8x32xf32>, vector<32x256xf32>, vector<8x256xf32> -> vector<8x256xf32>
    %c0_19 = arith.constant 0 : index
    %c0_20 = arith.constant 0 : index
    %26 = vector.load %arg8[%c0_19, %c0_20] : memref<1x256xf32, #tpu.memory_space<vmem>>, vector<1x256xf32>
    %27 = vector.broadcast %26 : vector<1x256xf32> to vector<8x256xf32>
    %28 = arith.addf %25, %27 : vector<8x256xf32>
    %cst_21 = arith.constant 0.000000e+00 : f32
    %29 = vector.broadcast %cst_21 : f32 to vector<8x256xf32>
    %30 = arith.maximumf %28, %29 : vector<8x256xf32>
    %c0_22 = arith.constant 0 : index
    %c0_23 = arith.constant 0 : index
    %31 = vector.load %arg9[%c0_22, %c0_23] : memref<256x6xf32, #tpu.memory_space<vmem>>, vector<256x6xf32>
    %cst_24 = arith.constant dense<0.000000e+00> : vector<8x6xf32>
    %32 = tpu.matmul %30, %31, %cst_24 {dimension_numbers = #tpu.dot_dimension_numbers<[1], [0], [0], [1], [0, 0, 1, 1], [], []>} : vector<8x256xf32>, vector<256x6xf32>, vector<8x6xf32> -> vector<8x6xf32>
    %c0_25 = arith.constant 0 : index
    %c0_26 = arith.constant 0 : index
    %33 = vector.load %arg10[%c0_25, %c0_26] : memref<1x6xf32, #tpu.memory_space<vmem>>, vector<1x6xf32>
    %34 = vector.broadcast %33 : vector<1x6xf32> to vector<8x6xf32>
    %35 = arith.addf %32, %34 : vector<8x6xf32>
    %cst_27 = arith.constant 0.000000e+00 : f32
    %36 = vector.broadcast %cst_27 : f32 to vector<8x6xf32>
    %37 = arith.maximumf %35, %36 : vector<8x6xf32>
    %38 = math.absf %35 : vector<8x6xf32>
    %cst_28 = arith.constant 0.000000e+00 : f32
    %39 = vector.broadcast %cst_28 : f32 to vector<8x6xf32>
    %40 = arith.subf %39, %38 : vector<8x6xf32>
    %41 = math.exp %40 : vector<8x6xf32>
    %42 = math.log1p %41 : vector<8x6xf32>
    %43 = arith.addf %37, %42 : vector<8x6xf32>
    %cst_29 = arith.constant 0.000000e+00 : f32
    %44 = vector.broadcast %cst_29 : f32 to vector<8x52xf32>
    %45 = tpu.concatenate %20, %22, %43, %44 in 1 : vector<8x60xf32>, vector<8x10xf32>, vector<8x6xf32>, vector<8x52xf32> -> vector<8x128xf32>
    %c0_30 = arith.constant 0 : index
    %c0_31 = arith.constant 0 : index
    %46 = vector.load %arg11[%c0_30, %c0_31] : memref<8x128xf32, #tpu.memory_space<vmem>>, vector<8x128xf32>
    tpu.vector_store %arg11[%c0_30, %c0_31], %45 {strides = array<i32>} : memref<8x128xf32, #tpu.memory_space<vmem>>, vector<8x128xf32>,
    return
  }
  func.func @transform_0(%arg0: i32) -> (i32, i32) {
    %c0_i32 = arith.constant 0 : i32
    %c0_i32_0 = arith.constant 0 : i32
    return %arg0, %c0_i32 : i32, i32
  }
  func.func @transform_1(%arg0: i32) -> (i32, i32) {
    %c0_i32 = arith.constant 0 : i32
    %c0_i32_0 = arith.constant 0 : i32
    %c0_i32_1 = arith.constant 0 : i32
    return %c0_i32, %c0_i32_0 : i32, i32
  }
  func.func @transform_2(%arg0: i32) -> (i32, i32) {
    %c0_i32 = arith.constant 0 : i32
    %c0_i32_0 = arith.constant 0 : i32
    %c0_i32_1 = arith.constant 0 : i32
    return %c0_i32, %c0_i32_0 : i32, i32
  }
  func.func @transform_3(%arg0: i32) -> (i32, i32) {
    %c0_i32 = arith.constant 0 : i32
    %c0_i32_0 = arith.constant 0 : i32
    %c0_i32_1 = arith.constant 0 : i32
    return %c0_i32, %c0_i32_0 : i32, i32
  }
  func.func @transform_4(%arg0: i32) -> (i32, i32) {
    %c0_i32 = arith.constant 0 : i32
    %c0_i32_0 = arith.constant 0 : i32
    %c0_i32_1 = arith.constant 0 : i32
    return %c0_i32, %c0_i32_0 : i32, i32
  }
  func.func @transform_5(%arg0: i32) -> (i32, i32) {
    %c0_i32 = arith.constant 0 : i32
    %c0_i32_0 = arith.constant 0 : i32
    %c0_i32_1 = arith.constant 0 : i32
    return %c0_i32, %c0_i32_0 : i32, i32
  }
  func.func @transform_6(%arg0: i32) -> (i32, i32) {
    %c0_i32 = arith.constant 0 : i32
    %c0_i32_0 = arith.constant 0 : i32
    %c0_i32_1 = arith.constant 0 : i32
    return %c0_i32, %c0_i32_0 : i32, i32
  }
  func.func @transform_7(%arg0: i32) -> (i32, i32) {
    %c0_i32 = arith.constant 0 : i32
    %c0_i32_0 = arith.constant 0 : i32
    %c0_i32_1 = arith.constant 0 : i32
    return %c0_i32, %c0_i32_0 : i32, i32
  }
  func.func @transform_8(%arg0: i32) -> (i32, i32) {
    %c0_i32 = arith.constant 0 : i32
    %c0_i32_0 = arith.constant 0 : i32
    %c0_i32_1 = arith.constant 0 : i32
    return %c0_i32, %c0_i32_0 : i32, i32
  }
  func.func @transform_9(%arg0: i32) -> (i32, i32) {
    %c0_i32 = arith.constant 0 : i32
    %c0_i32_0 = arith.constant 0 : i32
    %c0_i32_1 = arith.constant 0 : i32
    return %c0_i32, %c0_i32_0 : i32, i32
  }
  func.func @transform_10(%arg0: i32) -> (i32, i32) {
    %c0_i32 = arith.constant 0 : i32
    %c0_i32_0 = arith.constant 0 : i32
    return %arg0, %c0_i32 : i32, i32
  }
}

</mosaic_0001>

<llo_original>
// kernel: tpu_custom_call.1
$region0: #{tpu_custom_call.1}
  #allocation0 [shape = 'u32[]', space=smem, size = 0x4, offset = 0x4, fixed_abs, tag = 'smem constant byte address 0x4 - core index']
  #allocation1 [shape = 'u32[72,128]{1,0:T(1,128)}', space=vmem, size = 0x9000, scoped, tag = 'internal scratch']
  %s0 = inlined_call_operand.vmem [shape: f32[8,192], index: 0, kind: input, shape index: {}]
  %s1 = inlined_call_operand.vmem [shape: f32[192,192], index: 1, kind: input, shape index: {}]
  %s2 = inlined_call_operand.vmem [shape: f32[1,192], index: 2, kind: input, shape index: {}]
  %s3 = inlined_call_operand.vmem [shape: f32[192,60], index: 3, kind: input, shape index: {}]
  %s4 = inlined_call_operand.vmem [shape: f32[1,60], index: 4, kind: input, shape index: {}]
  %s5 = inlined_call_operand.vmem [shape: f32[60,10], index: 5, kind: input, shape index: {}]
  %s6 = inlined_call_operand.vmem [shape: f32[32,256], index: 6, kind: input, shape index: {}]
  %s7 = inlined_call_operand.vmem [shape: f32[1,256], index: 7, kind: input, shape index: {}]
  %s8 = inlined_call_operand.vmem [shape: f32[256,6], index: 8, kind: input, shape index: {}]
  %s9 = inlined_call_operand.vmem [shape: f32[1,6], index: 9, kind: input, shape index: {}]
  %s10 = inlined_call_operand.hbm [shape: f32[8,128], index: 10, kind: output, shape index: {}]
  %s11 = sld [smem:[#allocation0]]
  $region50: #{tpu_custom_call.1} parent=0
    _
  %s13 = ssub.s32 1, %s11
  %s14 = scalar_select 0, %s13, %s11
  $region1: #{tpu_custom_call.1} parent=0
    #allocation2 [shape = 'u8[4096]{0}', space=vmem, size = 0x1000, scoped, tag = 'output window, operand 0, single buffered']
    #allocation3 [shape = 's32[1]{0}', space=sflag, size = 0x4, scoped, tag = 'scoped memory for tpu_custom_call.1']
    %15 = vsyncpa [#allocation3], 0
    // Predicated region
    $region2: #{tpu_custom_call.1} parent=1 // pred_check
      _
    $region3: #{tpu_custom_call.1} parent=1 // pred_check_branch
      %17 = sbr.rel (0) target = $region5
    $region4: #{tpu_custom_call.1} parent=1 // pred_region
      _
    $region5: #{tpu_custom_call.1} parent=1 // pred_fallthru
      _
    // Predicated region
    $region6: #{tpu_custom_call.1} parent=1 // pred_check
      _
    $region7: #{tpu_custom_call.1} parent=1 // pred_check_branch
      %19 = sbr.rel (0) target = $region9
    $region8: #{tpu_custom_call.1} parent=1 // pred_region
      _
    $region9: #{tpu_custom_call.1} parent=1 // pred_fallthru
      _
    // Predicated region
    $region10: #{tpu_custom_call.1} parent=1 // pred_check
      _
    $region11: #{tpu_custom_call.1} parent=1 // pred_check_branch
      %21 = sbr.rel (0) target = $region13
    $region12: #{tpu_custom_call.1} parent=1 // pred_region
      _
    $region13: #{tpu_custom_call.1} parent=1 // pred_fallthru
      _
    // Predicated region
    $region14: #{tpu_custom_call.1} parent=1 // pred_check
      _
    $region15: #{tpu_custom_call.1} parent=1 // pred_check_branch
      %23 = sbr.rel (0) target = $region17
    $region16: #{tpu_custom_call.1} parent=1 // pred_region
      _
    $region17: #{tpu_custom_call.1} parent=1 // pred_fallthru
      _
    // Predicated region
    $region18: #{tpu_custom_call.1} parent=1 // pred_check
      _
    $region19: #{tpu_custom_call.1} parent=1 // pred_check_branch
      %25 = sbr.rel (0) target = $region21
    $region20: #{tpu_custom_call.1} parent=1 // pred_region
      _
    $region21: #{tpu_custom_call.1} parent=1 // pred_fallthru
      _
    // Predicated region
    $region22: #{tpu_custom_call.1} parent=1 // pred_check
      _
    $region23: #{tpu_custom_call.1} parent=1 // pred_check_branch
      %27 = sbr.rel (0) target = $region25
    $region24: #{tpu_custom_call.1} parent=1 // pred_region
      _
    $region25: #{tpu_custom_call.1} parent=1 // pred_fallthru
      _
    // Predicated region
    $region26: #{tpu_custom_call.1} parent=1 // pred_check
      _
    $region27: #{tpu_custom_call.1} parent=1 // pred_check_branch
      %29 = sbr.rel (0) target = $region29
    $region28: #{tpu_custom_call.1} parent=1 // pred_region
      _
    $region29: #{tpu_custom_call.1} parent=1 // pred_fallthru
      _
    // Predicated region
    $region30: #{tpu_custom_call.1} parent=1 // pred_check
      _
    $region31: #{tpu_custom_call.1} parent=1 // pred_check_branch
      %31 = sbr.rel (0) target = $region33
    $region32: #{tpu_custom_call.1} parent=1 // pred_region
      _
    $region33: #{tpu_custom_call.1} parent=1 // pred_fallthru
      _
    // Predicated region
    $region34: #{tpu_custom_call.1} parent=1 // pred_check
      _
    $region35: #{tpu_custom_call.1} parent=1 // pred_check_branch
      %33 = sbr.rel (0) target = $region37
    $region36: #{tpu_custom_call.1} parent=1 // pred_region
      _
    $region37: #{tpu_custom_call.1} parent=1 // pred_fallthru
      _
    // Predicated region
    $region38: #{tpu_custom_call.1} parent=1 // pred_check
      _
    $region39: #{tpu_custom_call.1} parent=1 // pred_check_branch
      %35 = sbr.rel (0) target = $region41
    $region40: #{tpu_custom_call.1} parent=1 // pred_region
      _
    $region41: #{tpu_custom_call.1} parent=1 // pred_fallthru
      _
    %v36 = vld [vmem:[%s0] sm:$0xff]
    %v37 = vld [vmem:[%s0 + $0x8] sm:$0xff]
    %v38 = vld [vmem:[%s1] sm:$0xff]
    %v39 = vld [vmem:[%s1 + $0x8] sm:$0xff]
    %v40 = vld [vmem:[%s1 + $0x10] sm:$0xff]
    %v41 = vld [vmem:[%s1 + $0x18] sm:$0xff]
    %v42 = vld [vmem:[%s1 + $0x20] sm:$0xff]
    %v43 = vld [vmem:[%s1 + $0x28] sm:$0xff]
    %v44 = vld [vmem:[%s1 + $0x30] sm:$0xff]
    %v45 = vld [vmem:[%s1 + $0x38] sm:$0xff]
    %v46 = vld [vmem:[%s1 + $0x40] sm:$0xff]
    %v47 = vld [vmem:[%s1 + $0x48] sm:$0xff]
    %v48 = vld [vmem:[%s1 + $0x50] sm:$0xff]
    %v49 = vld [vmem:[%s1 + $0x58] sm:$0xff]
    %v50 = vld [vmem:[%s1 + $0x60] sm:$0xff]
    %v51 = vld [vmem:[%s1 + $0x68] sm:$0xff]
    %v52 = vld [vmem:[%s1 + $0x70] sm:$0xff]
    %v53 = vld [vmem:[%s1 + $0x78] sm:$0xff]
    %v54 = vld [vmem:[%s1 + $0x80] sm:$0xff]
    %v55 = vld [vmem:[%s1 + $0x88] sm:$0xff]
    %v56 = vld [vmem:[%s1 + $0x90] sm:$0xff]
    %v57 = vld [vmem:[%s1 + $0x98] sm:$0xff]
    %v58 = vld [vmem:[%s1 + $0xa0] sm:$0xff]
    %v59 = vld [vmem:[%s1 + $0xa8] sm:$0xff]
    %v60 = vld [vmem:[%s1 + $0xb0] sm:$0xff]
    %v61 = vld [vmem:[%s1 + $0xb8] sm:$0xff]
    %v62 = vld [vmem:[%s1 + $0xc0] sm:$0xff]
    %v63 = vld [vmem:[%s1 + $0xc8] sm:$0xff]
    %v64 = vld [vmem:[%s1 + $0xd0] sm:$0xff]
    %v65 = vld [vmem:[%s1 + $0xd8] sm:$0xff]
    %v66 = vld [vmem:[%s1 + $0xe0] sm:$0xff]
    %v67 = vld [vmem:[%s1 + $0xe8] sm:$0xff]
    %v68 = vld [vmem:[%s1 + $0xf0] sm:$0xff]
    %v69 = vld [vmem:[%s1 + $0xf8] sm:$0xff]
    %v70 = vld [vmem:[%s1 + $0x100] sm:$0xff]
    %v71 = vld [vmem:[%s1 + $0x108] sm:$0xff]
    %v72 = vld [vmem:[%s1 + $0x110] sm:$0xff]
    %v73 = vld [vmem:[%s1 + $0x118] sm:$0xff]
    %v74 = vld [vmem:[%s1 + $0x120] sm:$0xff]
    %v75 = vld [vmem:[%s1 + $0x128] sm:$0xff]
    %v76 = vld [vmem:[%s1 + $0x130] sm:$0xff]
    %v77 = vld [vmem:[%s1 + $0x138] sm:$0xff]
    %v78 = vld [vmem:[%s1 + $0x140] sm:$0xff]
    %v79 = vld [vmem:[%s1 + $0x148] sm:$0xff]
    %v80 = vld [vmem:[%s1 + $0x150] sm:$0xff]
    %v81 = vld [vmem:[%s1 + $0x158] sm:$0xff]
    %v82 = vld [vmem:[%s1 + $0x160] sm:$0xff]
    %v83 = vld [vmem:[%s1 + $0x168] sm:$0xff]
    %v84 = vld [vmem:[%s1 + $0x170] sm:$0xff]
    %v85 = vld [vmem:[%s1 + $0x178] sm:$0xff]
    %v86 = vld [vmem:[%s2] sm:$0x3]
    %v88 = vperm.slane %v86, 0
    %v89 = vperm.slane %v86, 1
    %vm92 = vcmask 523264
    %v94 = vsel %vm92, %v37, 0
    %96 = vmatpush.msra.mxu0 %v68
    %97 = vmatpush.msra.mxu0 %v66
    %98 = vmatpush.msra.mxu0 %v64
    %99 = vmatpush.msra.mxu0 %v62
    %100 = vmatpush.msra.mxu0 %v60
    %101 = vmatpush.msra.mxu0 %v58
    %102 = vmatpush.msra.mxu0 %v56
    %103 = vmatpush.msra.mxu0 %v54
    %104 = vmatpush.msra.mxu0 %v52
    %105 = vmatpush.msra.mxu0 %v50
    %106 = vmatpush.msra.mxu0 %v48
    %107 = vmatpush.msra.mxu0 %v46
    %108 = vmatpush.msra.mxu0 %v44
    %109 = vmatpush.msra.mxu0 %v42
    %110 = vmatpush.msra.mxu0 %v40
    %111 = vmatpush.msra.mxu0 %v38
    %112 = vmatmul.f32.gmra.mxu0 %v36
    %v113 = vpop.f32.mrf.mxu0
    %v114 = vadd.f32 %v88, %v113
    %115 = vdwg.mxu0
    %116 = vmatpush.msra.mxu0 0.0
    %117 = vmatpush.msra.mxu0 0.0
    %118 = vmatpush.msra.mxu0 0.0
    %119 = vmatpush.msra.mxu0 0.0
    %120 = vmatpush.msra.mxu0 0.0
    %121 = vmatpush.msra.mxu0 0.0
    %122 = vmatpush.msra.mxu0 0.0
    %123 = vmatpush.msra.mxu0 0.0
    %124 = vmatpush.msra.mxu0 %v84
    %125 = vmatpush.msra.mxu0 %v82
    %126 = vmatpush.msra.mxu0 %v80
    %127 = vmatpush.msra.mxu0 %v78
    %128 = vmatpush.msra.mxu0 %v76
    %129 = vmatpush.msra.mxu0 %v74
    %130 = vmatpush.msra.mxu0 %v72
    %131 = vmatpush.msra.mxu0 %v70
    %132 = vmatmul.f32.gmra.mxu0 %v94
    %v133 = vpop.f32.mrf.mxu0
    %v134 = vadd.f32 %v114, %v133
    %135 = vdwg.mxu0
    %136 = vmatpush.msra.mxu0 %v69
    %137 = vmatpush.msra.mxu0 %v67
    %138 = vmatpush.msra.mxu0 %v65
    %139 = vmatpush.msra.mxu0 %v63
    %140 = vmatpush.msra.mxu0 %v61
    %141 = vmatpush.msra.mxu0 %v59
    %142 = vmatpush.msra.mxu0 %v57
    %143 = vmatpush.msra.mxu0 %v55
    %144 = vmatpush.msra.mxu0 %v53
    %145 = vmatpush.msra.mxu0 %v51
    %146 = vmatpush.msra.mxu0 %v49
    %147 = vmatpush.msra.mxu0 %v47
    %148 = vmatpush.msra.mxu0 %v45
    %149 = vmatpush.msra.mxu0 %v43
    %150 = vmatpush.msra.mxu0 %v41
    %151 = vmatpush.msra.mxu0 %v39
    %152 = vmatmul.f32.gmra.mxu0 %v36
    %v153 = vpop.f32.mrf.mxu0
    %v154 = vadd.f32 %v89, %v153
    %155 = vdwg.mxu0
    %156 = vmatpush.msra.mxu0 0.0
    %157 = vmatpush.msra.mxu0 0.0
    %158 = vmatpush.msra.mxu0 0.0
    %159 = vmatpush.msra.mxu0 0.0
    %160 = vmatpush.msra.mxu0 0.0
    %161 = vmatpush.msra.mxu0 0.0
    %162 = vmatpush.msra.mxu0 0.0
    %163 = vmatpush.msra.mxu0 0.0
    %164 = vmatpush.msra.mxu0 %v85
    %165 = vmatpush.msra.mxu0 %v83
    %166 = vmatpush.msra.mxu0 %v81
    %167 = vmatpush.msra.mxu0 %v79
    %168 = vmatpush.msra.mxu0 %v77
    %169 = vmatpush.msra.mxu0 %v75
    %170 = vmatpush.msra.mxu0 %v73
    %171 = vmatpush.msra.mxu0 %v71
    %172 = vmatmul.f32.gmra.mxu0 %v94
    %v173 = vpop.f32.mrf.mxu0
    %v174 = vadd.f32 %v154, %v173
    %175 = vdwg.mxu0
    %v176 = vmax.f32 %v134, 0.0
    %v177 = vmax.f32 %v174, 0.0
    %v178 = vld [vmem:[%s3] sm:$0xff]
    %v179 = vld [vmem:[%s3 + $0x8] sm:$0xff]
    %v180 = vld [vmem:[%s3 + $0x10] sm:$0xff]
    %v181 = vld [vmem:[%s3 + $0x18] sm:$0xff]
    %v182 = vld [vmem:[%s3 + $0x20] sm:$0xff]
    %v183 = vld [vmem:[%s3 + $0x28] sm:$0xff]
    %v184 = vld [vmem:[%s3 + $0x30] sm:$0xff]
    %v185 = vld [vmem:[%s3 + $0x38] sm:$0xff]
    %v186 = vld [vmem:[%s3 + $0x40] sm:$0xff]
    %v187 = vld [vmem:[%s3 + $0x48] sm:$0xff]
    %v188 = vld [vmem:[%s3 + $0x50] sm:$0xff]
    %v189 = vld [vmem:[%s3 + $0x58] sm:$0xff]
    %v190 = vld [vmem:[%s3 + $0x60] sm:$0xff]
    %v191 = vld [vmem:[%s3 + $0x68] sm:$0xff]
    %v192 = vld [vmem:[%s3 + $0x70] sm:$0xff]
    %v193 = vld [vmem:[%s3 + $0x78] sm:$0xff]
    %v194 = vld [vmem:[%s3 + $0x80] sm:$0xff]
    %v195 = vld [vmem:[%s3 + $0x88] sm:$0xff]
    %v196 = vld [vmem:[%s3 + $0x90] sm:$0xff]
    %v197 = vld [vmem:[%s3 + $0x98] sm:$0xff]
    %v198 = vld [vmem:[%s3 + $0xa0] sm:$0xff]
    %v199 = vld [vmem:[%s3 + $0xa8] sm:$0xff]
    %v200 = vld [vmem:[%s3 + $0xb0] sm:$0xff]
    %v201 = vld [vmem:[%s3 + $0xb8] sm:$0xff]
    %v202 = vld [vmem:[%s4] sm:$0x1]
    %v204 = vperm.slane %v202, 0
    %v207 = vsel %vm92, %v177, 0
    %209 = vmatpush.msra.mxu0 %v193
    %210 = vmatpush.msra.mxu0 %v192
    %211 = vmatpush.msra.mxu0 %v191
    %212 = vmatpush.msra.mxu0 %v190
    %213 = vmatpush.msra.mxu0 %v189
    %214 = vmatpush.msra.mxu0 %v188
    %215 = vmatpush.msra.mxu0 %v187
    %216 = vmatpush.msra.mxu0 %v186
    %217 = vmatpush.msra.mxu0 %v185
    %218 = vmatpush.msra.mxu0 %v184
    %219 = vmatpush.msra.mxu0 %v183
    %220 = vmatpush.msra.mxu0 %v182
    %221 = vmatpush.msra.mxu0 %v181
    %222 = vmatpush.msra.mxu0 %v180
    %223 = vmatpush.msra.mxu0 %v179
    %224 = vmatpush.msra.mxu0 %v178
    %225 = vmatmul.f32.gmra.mxu0 %v176
    %v226 = vpop.f32.mrf.mxu0
    %v227 = vadd.f32 %v204, %v226
    %228 = vdwg.mxu0
    %229 = vmatpush.msra.mxu0 0.0
    %230 = vmatpush.msra.mxu0 0.0
    %231 = vmatpush.msra.mxu0 0.0
    %232 = vmatpush.msra.mxu0 0.0
    %233 = vmatpush.msra.mxu0 0.0
    %234 = vmatpush.msra.mxu0 0.0
    %235 = vmatpush.msra.mxu0 0.0
    %236 = vmatpush.msra.mxu0 0.0
    %237 = vmatpush.msra.mxu0 %v201
    %238 = vmatpush.msra.mxu0 %v200
    %239 = vmatpush.msra.mxu0 %v199
    %240 = vmatpush.msra.mxu0 %v198
    %241 = vmatpush.msra.mxu0 %v197
    %242 = vmatpush.msra.mxu0 %v196
    %243 = vmatpush.msra.mxu0 %v195
    %244 = vmatpush.msra.mxu0 %v194
    %245 = vmatmul.f32.gmra.mxu0 %v207
    %v246 = vpop.f32.mrf.mxu0
    %v247 = vadd.f32 %v227, %v246
    %248 = vdwg.mxu0
    %v249 = vmax.f32 %v247, 0.0
    %v250 = vand.u32 2147483647, %v247
    %v251 = vsub.f32 0.0, %v250
    %v252 = vmul.f32 %v251, 1.442695
    %v253 = vpow.pop %v252
    %v254 = vadd.f32 %v253, 1.0
    %v255 = vlog2.pop %v254
    %v256 = vmul.f32 %v255, 0.6931472
    %v257 = vmul.f32 -0.5, %v253
    %v258 = vadd.f32 %v257, 1.0
    %v259 = vmul.f32 %v258, %v253
    %v260 = vand.u32 2147483647, %v253
    %vm261 = vcmp.lt.f32.partialorder %v260, 0.0004427343
    %v262 = vsel %vm261, %v259, %v256
    %v263 = vadd.f32 %v249, %v262
    %v264 = vld [vmem:[%s5] sm:$0xff]
    %v265 = vld [vmem:[%s5 + $0x8] sm:$0xff]
    %v266 = vld [vmem:[%s5 + $0x10] sm:$0xff]
    %v267 = vld [vmem:[%s5 + $0x18] sm:$0xff]
    %v268 = vld [vmem:[%s5 + $0x20] sm:$0xff]
    %v269 = vld [vmem:[%s5 + $0x28] sm:$0xff]
    %v270 = vld [vmem:[%s5 + $0x30] sm:$0xff]
    %v271 = vld [vmem:[%s5 + $0x38] sm:$0xf]
    %vm272 = vcmask 490496
    %v274 = vsel %vm272, %v263, 0
    %vm276 = vcmask 1043456
    %v278 = vsel %vm276, %v271, 0
    %280 = vmatpush.msra.mxu0 0.0
    %281 = vmatpush.msra.mxu0 0.0
    %282 = vmatpush.msra.mxu0 0.0
    %283 = vmatpush.msra.mxu0 0.0
    %284 = vmatpush.msra.mxu0 0.0
    %285 = vmatpush.msra.mxu0 0.0
    %286 = vmatpush.msra.mxu0 0.0
    %287 = vmatpush.msra.mxu0 0.0
    %288 = vmatpush.msra.mxu0 %v278
    %289 = vmatpush.msra.mxu0 %v270
    %290 = vmatpush.msra.mxu0 %v269
    %291 = vmatpush.msra.mxu0 %v268
    %292 = vmatpush.msra.mxu0 %v267
    %293 = vmatpush.msra.mxu0 %v266
    %294 = vmatpush.msra.mxu0 %v265
    %295 = vmatpush.msra.mxu0 %v264
    %296 = vmatmul.f32.gmra.mxu0 %v274
    %v297 = vpop.f32.mrf.mxu0
    %v298 = vadd.f32 0.0, %v297
    %299 = vdwg.mxu0
    %v300 = vld [vmem:[%s6] sm:$0xff]
    %v301 = vld [vmem:[%s6 + $0x8] sm:$0xff]
    %v302 = vld [vmem:[%s6 + $0x10] sm:$0xff]
    %v303 = vld [vmem:[%s6 + $0x18] sm:$0xff]
    %v304 = vld [vmem:[%s6 + $0x20] sm:$0xff]
    %v305 = vld [vmem:[%s6 + $0x28] sm:$0xff]
    %v306 = vld [vmem:[%s6 + $0x30] sm:$0xff]
    %v307 = vld [vmem:[%s6 + $0x38] sm:$0xff]
    %v308 = vld [vmem:[%s7] sm:$0x3]
    %v310 = vperm.slane %v308, 0
    %v311 = vperm.slane %v308, 1
    %vm314 = vcmask 261120
    %v316 = vsel %vm314, %v36, 0
    %318 = vmatpush.msra.mxu0 0.0
    %319 = vmatpush.msra.mxu0 0.0
    %320 = vmatpush.msra.mxu0 0.0
    %321 = vmatpush.msra.mxu0 0.0
    %322 = vmatpush.msra.mxu0 0.0
    %323 = vmatpush.msra.mxu0 0.0
    %324 = vmatpush.msra.mxu0 0.0
    %325 = vmatpush.msra.mxu0 0.0
    %326 = vmatpush.msra.mxu0 0.0
    %327 = vmatpush.msra.mxu0 0.0
    %328 = vmatpush.msra.mxu0 0.0
    %329 = vmatpush.msra.mxu0 0.0
    %330 = vmatpush.msra.mxu0 %v306
    %331 = vmatpush.msra.mxu0 %v304
    %332 = vmatpush.msra.mxu0 %v302
    %333 = vmatpush.msra.mxu0 %v300
    %334 = vmatmul.f32.gmra.mxu0 %v316
    %v335 = vpop.f32.mrf.mxu0
    %v336 = vadd.f32 %v310, %v335
    %337 = vdwg.mxu0
    %338 = vmatpush.msra.mxu0 0.0
    %339 = vmatpush.msra.mxu0 0.0
    %340 = vmatpush.msra.mxu0 0.0
    %341 = vmatpush.msra.mxu0 0.0
    %342 = vmatpush.msra.mxu0 0.0
    %343 = vmatpush.msra.mxu0 0.0
    %344 = vmatpush.msra.mxu0 0.0
    %345 = vmatpush.msra.mxu0 0.0
    %346 = vmatpush.msra.mxu0 0.0
    %347 = vmatpush.msra.mxu0 0.0
    %348 = vmatpush.msra.mxu0 0.0
    %349 = vmatpush.msra.mxu0 0.0
    %350 = vmatpush.msra.mxu0 %v307
    %351 = vmatpush.msra.mxu0 %v305
    %352 = vmatpush.msra.mxu0 %v303
    %353 = vmatpush.msra.mxu0 %v301
    %354 = vmatmul.f32.gmra.mxu0 %v316
    %v355 = vpop.f32.mrf.mxu0
    %v356 = vadd.f32 %v311, %v355
    %357 = vdwg.mxu0
    %v358 = vmax.f32 %v336, 0.0
    %v359 = vmax.f32 %v356, 0.0
    %v360 = vld [vmem:[%s8] sm:$0xff]
    %v361 = vld [vmem:[%s8 + $0x8] sm:$0xff]
    %v362 = vld [vmem:[%s8 + $0x10] sm:$0xff]
    %v363 = vld [vmem:[%s8 + $0x18] sm:$0xff]
    %v364 = vld [vmem:[%s8 + $0x20] sm:$0xff]
    %v365 = vld [vmem:[%s8 + $0x28] sm:$0xff]
    %v366 = vld [vmem:[%s8 + $0x30] sm:$0xff]
    %v367 = vld [vmem:[%s8 + $0x38] sm:$0xff]
    %v368 = vld [vmem:[%s8 + $0x40] sm:$0xff]
    %v369 = vld [vmem:[%s8 + $0x48] sm:$0xff]
    %v370 = vld [vmem:[%s8 + $0x50] sm:$0xff]
    %v371 = vld [vmem:[%s8 + $0x58] sm:$0xff]
    %v372 = vld [vmem:[%s8 + $0x60] sm:$0xff]
    %v373 = vld [vmem:[%s8 + $0x68] sm:$0xff]
    %v374 = vld [vmem:[%s8 + $0x70] sm:$0xff]
    %v375 = vld [vmem:[%s8 + $0x78] sm:$0xff]
    %v376 = vld [vmem:[%s8 + $0x80] sm:$0xff]
    %v377 = vld [vmem:[%s8 + $0x88] sm:$0xff]
    %v378 = vld [vmem:[%s8 + $0x90] sm:$0xff]
    %v379 = vld [vmem:[%s8 + $0x98] sm:$0xff]
    %v380 = vld [vmem:[%s8 + $0xa0] sm:$0xff]
    %v381 = vld [vmem:[%s8 + $0xa8] sm:$0xff]
    %v382 = vld [vmem:[%s8 + $0xb0] sm:$0xff]
    %v383 = vld [vmem:[%s8 + $0xb8] sm:$0xff]
    %v384 = vld [vmem:[%s8 + $0xc0] sm:$0xff]
    %v385 = vld [vmem:[%s8 + $0xc8] sm:$0xff]
    %v386 = vld [vmem:[%s8 + $0xd0] sm:$0xff]
    %v387 = vld [vmem:[%s8 + $0xd8] sm:$0xff]
    %v388 = vld [vmem:[%s8 + $0xe0] sm:$0xff]
    %v389 = vld [vmem:[%s8 + $0xe8] sm:$0xff]
    %v390 = vld [vmem:[%s8 + $0xf0] sm:$0xff]
    %v391 = vld [vmem:[%s8 + $0xf8] sm:$0xff]
    %v392 = vld [vmem:[%s9] sm:$0x1]
    %v394 = vperm.slane %v392, 0
    %396 = vmatpush.msra.mxu0 %v375
    %397 = vmatpush.msra.mxu0 %v374
    %398 = vmatpush.msra.mxu0 %v373
    %399 = vmatpush.msra.mxu0 %v372
    %400 = vmatpush.msra.mxu0 %v371
    %401 = vmatpush.msra.mxu0 %v370
    %402 = vmatpush.msra.mxu0 %v369
    %403 = vmatpush.msra.mxu0 %v368
    %404 = vmatpush.msra.mxu0 %v367
    %405 = vmatpush.msra.mxu0 %v366
    %406 = vmatpush.msra.mxu0 %v365
    %407 = vmatpush.msra.mxu0 %v364
    %408 = vmatpush.msra.mxu0 %v363
    %409 = vmatpush.msra.mxu0 %v362
    %410 = vmatpush.msra.mxu0 %v361
    %411 = vmatpush.msra.mxu0 %v360
    %412 = vmatmul.f32.gmra.mxu0 %v358
    %v413 = vpop.f32.mrf.mxu0
    %v414 = vadd.f32 %v394, %v413
    %415 = vdwg.mxu0
    %416 = vmatpush.msra.mxu0 %v391
    %417 = vmatpush.msra.mxu0 %v390
    %418 = vmatpush.msra.mxu0 %v389
    %419 = vmatpush.msra.mxu0 %v388
    %420 = vmatpush.msra.mxu0 %v387
    %421 = vmatpush.msra.mxu0 %v386
    %422 = vmatpush.msra.mxu0 %v385
    %423 = vmatpush.msra.mxu0 %v384
    %424 = vmatpush.msra.mxu0 %v383
    %425 = vmatpush.msra.mxu0 %v382
    %426 = vmatpush.msra.mxu0 %v381
    %427 = vmatpush.msra.mxu0 %v380
    %428 = vmatpush.msra.mxu0 %v379
    %429 = vmatpush.msra.mxu0 %v378
    %430 = vmatpush.msra.mxu0 %v377
    %431 = vmatpush.msra.mxu0 %v376
    %432 = vmatmul.f32.gmra.mxu0 %v359
    %v433 = vpop.f32.mrf.mxu0
    %v434 = vadd.f32 %v414, %v433
    %435 = vdwg.mxu0
    %v436 = vmax.f32 %v434, 0.0
    %v437 = vand.u32 2147483647, %v434
    %v438 = vsub.f32 0.0, %v437
    %v439 = vmul.f32 %v438, 1.442695
    %v440 = vpow.pop %v439
    %v441 = vadd.f32 %v440, 1.0
    %v442 = vlog2.pop %v441
    %v443 = vmul.f32 %v442, 0.6931472
    %v444 = vmul.f32 -0.5, %v440
    %v445 = vadd.f32 %v444, 1.0
    %v446 = vmul.f32 %v445, %v440
    %v447 = vand.u32 2147483647, %v440
    %vm448 = vcmp.lt.f32.partialorder %v447, 0.0004427343
    %v449 = vsel %vm448, %v446, %v443
    %v450 = vadd.f32 %v436, %v449
    %452 = vrot.lane.b32.xlu0 %v298, 60
    %v453 = vpop.permute.xlu0 %452
    %456 = vrot.lane.b32.xlu0 %v450, 70
    %v457 = vpop.permute.xlu0 %456
    %v459 = vsel %vm272, %v263, %v453
    %vm460 = vcmask 572416
    %v461 = vsel %vm460, %v459, %v457
    %vm462 = vcmask 621568
    %v463 = vsel %vm462, %v461, 0.0
    %464 = vst [vmem:[#allocation2] sm:$0xff] %v463
    // Predicated region
    $region42: #{tpu_custom_call.1} parent=1 // pred_check
      _
    $region43: #{tpu_custom_call.1} parent=1 // pred_check_branch
      %466 = sbr.rel (0) target = $region45
    $region44: #{tpu_custom_call.1} parent=1 // pred_region
      %468 = vsyncadd [#allocation3], 0
      %s470 = sshll.u32 [#allocation2], 4
      %s471 = int_to_ptr.vmem [resolvable:$true] %s470
      %s472 = sshll.u32 %s10, 4
      %s473 = int_to_ptr.hbm [resolvable:$true] %s472
      %475 = dma.vmem_to_hbm [thread:$0]  %s471, 128, %s473, [#allocation3]
    $region45: #{tpu_custom_call.1} parent=1 // pred_fallthru
      _
    // Predicated region
    $region46: #{tpu_custom_call.1} parent=1 // pred_check
      _
    $region47: #{tpu_custom_call.1} parent=1 // pred_check_branch
      %477 = sbr.rel (0) target = $region49
    $region48: #{tpu_custom_call.1} parent=1 // pred_region
      %479 = dma.done [#allocation3], 128
    $region49: #{tpu_custom_call.1} parent=1 // pred_fallthru
      _
    %480 = vsyncpa [#allocation3], 1

</llo_original>
